<compile_context>
chip_gen: v7x
topology: tpu7x:2x2x1
jax: 0.10.0
libtpu: 0.0.40
codegen_flags: <defaults>
</compile_context>

<pallas_src>
import math

import jax
import jax.numpy as jnp
from jax import lax
from jax.experimental import pallas as pl
from jax.experimental.pallas import tpu as pltpu


_SQRT_2_OVER_PI = 0.79788456                 # matches torch bias_gelu constant
_GELU_C = 0.79788456 * 0.044715              # folded inner-polynomial coefficient


def _round_up(x, m):
    return (x + m - 1) // m * m


def _cdiv(a, b):
    return -(-a // b)


def _choose_tm(M, *, max_tm=512, min_tm=128, sublane=16):
    """Row tile: balanced tiles, >=2 grid steps when possible (v7x has 2 TensorCores),
    capped at max_tm, 16-sublane aligned so bf16 packing is clean."""
    M_r = _round_up(M, sublane)
    if M_r <= min_tm:
        return M_r                             # tiny problem: single tile
    steps = max(2, _cdiv(M_r, max_tm))
    tm = _round_up(_cdiv(M_r, steps), sublane)
    return max(min(tm, max_tm), min_tm)


def _bert_head_transform_kernel(x_ref, w_ref, b_ref, gamma_ref, beta_ref, o_ref):
    # x_ref:        (tm, H_in)     input dtype (streamed row tile)
    # w_ref:        (H_in, H_out)  bf16, resident (pre-transposed in the wrapper)
    # b/gamma/beta: (1, H_out)     f32, resident
    # o_ref:        (tm, H_out)    input dtype
    x_bf = x_ref[...].astype(jnp.bfloat16)     # no-op when input is already bf16

    # x @ W^T with W pre-transposed to (H_in, H_out): plain contraction onto the MXU,
    # f32 accumulation.
    y = jnp.dot(x_bf, w_ref[...], preferred_element_type=jnp.float32)

    # Fused bias + tanh-GeLU (same form as torch bias_gelu), f32 epilogue.
    # TODO(synk): on v6e/v7x the polynomial could run in bf16 (2x VPU) -- kept f32 for
    # numerics and v5e compatibility.
    z = y + b_ref[...]
    inner = z * (_SQRT_2_OVER_PI + _GELU_C * (z * z))
    g = 0.5 * z * (1.0 + jnp.tanh(inner))

    # LayerNorm over the hidden (lane) axis, eps=1e-5, biased variance.
    # One-pass statistics (sum / sum-of-squares) in f32; safe only because the block's
    # last dim equals the full H (H is never tiled).
    h_inv = 1.0 / g.shape[-1]
    s1 = jnp.sum(g, axis=-1, keepdims=True)
    s2 = jnp.sum(g * g, axis=-1, keepdims=True)
    mean = s1 * h_inv
    var = jnp.maximum(s2 * h_inv - mean * mean, 0.0)   # guard tiny negative cancellation
    inv_std = lax.rsqrt(var + 1e-5)

    o_ref[...] = (((g - mean) * inv_std) * gamma_ref[...] + beta_ref[...]).astype(o_ref.dtype)


def prepare_params(weight, bias, ln_weight, ln_bias):
    """One-time parameter prep (weight transpose + bf16 cast, 2-D reshapes).

    Do this ONCE and reuse the result across forward calls; repeating it per call
    costs an extra HBM pass over the weight."""
    H_out, H_in = weight.shape
    w_t = jnp.asarray(weight).T.astype(jnp.bfloat16)               # (H_in, H_out)
    b2d = jnp.asarray(bias).reshape(1, H_out).astype(jnp.float32)
    g2d = jnp.asarray(ln_weight).reshape(1, H_out).astype(jnp.float32)
    be2d = jnp.asarray(ln_bias).reshape(1, H_out).astype(jnp.float32)
    return w_t, b2d, g2d, be2d


def bert_prediction_head_transform_prepared(hidden_states, w_t, b2d, g2d, be2d, *, tm_max=512):
    """hidden_states: (B, S, H_in) in its native dtype; w_t: (H_in, H_out) bf16."""
    B, S, H_in = hidden_states.shape
    H_out = w_t.shape[1]
    M = B * S

    tm = _choose_tm(M, max_tm=tm_max)
    M_pad = _round_up(M, tm)
    out_dtype = hidden_states.dtype

    x2d = hidden_states.reshape(M, H_in)
    if M_pad != M:
        x2d = jnp.pad(x2d, ((0, M_pad - M), (0, 0)))

    x_bytes = x2d.dtype.itemsize
    out_bytes = jnp.dtype(out_dtype).itemsize

    # NOTE: real BERT hidden sizes (768/1024) are lane-aligned; for H not a multiple of
    # 128 the output store would be masked (vst.msk) -- nothing done for that here.
    out = pl.pallas_call(
        _bert_head_transform_kernel,
        out_shape=jax.ShapeDtypeStruct((M_pad, H_out), out_dtype),
        grid_spec=pltpu.PrefetchScalarGridSpec(
            num_scalar_prefetch=0,
            grid=(M_pad // tm,),
            in_specs=[
                pl.BlockSpec((tm, H_in), lambda i: (i, 0)),       # x row-tile (streamed)
                pl.BlockSpec((H_in, H_out), lambda i: (0, 0)),    # weight, bf16, resident
                pl.BlockSpec((1, H_out), lambda i: (0, 0)),       # bias
                pl.BlockSpec((1, H_out), lambda i: (0, 0)),       # LN gamma
                pl.BlockSpec((1, H_out), lambda i: (0, 0)),       # LN beta
            ],
            out_specs=pl.BlockSpec((tm, H_out), lambda i: (i, 0)),
        ),
        compiler_params=pltpu.CompilerParams(
            dimension_semantics=("parallel",),
            vmem_limit_bytes=32 * 1024 * 1024,
        ),
        cost_estimate=pl.CostEstimate(
            flops=2 * M_pad * H_in * H_out,
            transcendentals=M_pad * H_out,
            bytes_accessed=(M_pad * H_in * x_bytes + M_pad * H_out * out_bytes
                            + H_in * H_out * 2 + 3 * H_out * 4),
        ),
    )(x2d, w_t, b2d, g2d, be2d)

    if M_pad != M:
        out = out[:M]
    return out.reshape(B, S, H_out)


def bert_prediction_head_transform(hidden_states, weight, bias, ln_weight, ln_bias, *, tm_max=512):
    """Convenience wrapper taking torch-Linear-layout params (weight: (H_out, H_in))."""
    w_t, b2d, g2d, be2d = prepare_params(weight, bias, ln_weight, ln_bias)
    return bert_prediction_head_transform_prepared(
        hidden_states, w_t, b2d, g2d, be2d, tm_max=tm_max)


if __name__ == "__main__":
    # Small, module-consistent shapes: batch=2, seq=8, hidden=32
    B, S, H = 2, 8, 32
    key = jax.random.PRNGKey(0)
    k_x, k_w, k_b = jax.random.split(key, 3)

    hidden_states = jax.random.normal(k_x, (B, S, H), dtype=jnp.float32)

    # Deterministic param init mirroring LinearActivation.reset_parameters
    # (kaiming_uniform_ with a=sqrt(5) => uniform(-1/sqrt(fan_in), +1/sqrt(fan_in)))
    bound = 1.0 / math.sqrt(H)
    weight = jax.random.uniform(k_w, (H, H), minval=-bound, maxval=bound,
                                dtype=jnp.float32)      # (out_features, in_features)
    bias = jax.random.uniform(k_b, (H,), minval=-bound, maxval=bound,
                              dtype=jnp.float32)
    ln_weight = jnp.ones((H,), dtype=jnp.float32)        # BertLayerNorm init
    ln_bias = jnp.zeros((H,), dtype=jnp.float32)

    # f32-input path
    out = bert_prediction_head_transform(hidden_states, weight, bias, ln_weight, ln_bias)
    jax.block_until_ready(out)

    # Pure-JAX f32 reference (kernel matmul runs in bf16 -> loosened tolerance).
    y = hidden_states.reshape(-1, H) @ weight.T
    z = y + bias
    g = z * 0.5 * (1.0 + jnp.tanh(0.79788456 * z * (1.0 + 0.044715 * z * z)))
    mean = g.mean(-1, keepdims=True)
    var = ((g - mean) ** 2).mean(-1, keepdims=True)
    ref = ((g - mean) / jnp.sqrt(var + 1e-5)) * ln_weight + ln_bias
    ref = ref.reshape(B, S, H)
    assert out.dtype == jnp.float32
    assert jnp.allclose(out, ref, atol=3e-2, rtol=3e-2), "mismatch vs reference (f32 input)"

    # bf16-input path (native streaming dtype, bf16 output) -- looser tolerance.
    out_bf = bert_prediction_head_transform(hidden_states.astype(jnp.bfloat16),
                                            weight, bias, ln_weight, ln_bias)
    jax.block_until_ready(out_bf)
    assert out_bf.dtype == jnp.bfloat16
    assert jnp.allclose(out_bf.astype(jnp.float32), ref, atol=1e-1, rtol=1e-1), \
        "mismatch vs reference (bf16 input)"

    print("KERNEL_OK")
</pallas_src>

<mosaic_0001>
module attributes {stable_mosaic.version = 11 : i64} {
  func.func @_bert_head_transform_kernel(%arg0: i32, %arg1: memref<16x32xf32, #tpu.memory_space<vmem>>, %arg2: memref<32x32xbf16, #tpu.memory_space<vmem>>, %arg3: memref<1x32xf32, #tpu.memory_space<vmem>>, %arg4: memref<1x32xf32, #tpu.memory_space<vmem>>, %arg5: memref<1x32xf32, #tpu.memory_space<vmem>>, %arg6: memref<16x32xf32, #tpu.memory_space<vmem>>) attributes {dimension_semantics = [#tpu.dimension_semantics<parallel>], iteration_bounds = array<i64: 1>, scalar_prefetch = 0 : i64, scratch_operands = 0 : i64, tpu.core_type = #tpu.core_type<tc>, window_params = [{transform_indices = @transform_0, window_bounds = array<i64: 16, 32>}, {pipeline_mode = #tpu.pipeline_mode<synchronous>, transform_indices = @transform_1, window_bounds = array<i64: 32, 32>}, {pipeline_mode = #tpu.pipeline_mode<synchronous>, transform_indices = @transform_2, window_bounds = array<i64: 1, 32>}, {pipeline_mode = #tpu.pipeline_mode<synchronous>, transform_indices = @transform_3, window_bounds = array<i64: 1, 32>}, {pipeline_mode = #tpu.pipeline_mode<synchronous>, transform_indices = @transform_4, window_bounds = array<i64: 1, 32>}, {transform_indices = @transform_5, window_bounds = array<i64: 16, 32>}]} {
    %c0 = arith.constant 0 : index
    %c0_0 = arith.constant 0 : index
    %0 = vector.load %arg1[%c0, %c0_0] : memref<16x32xf32, #tpu.memory_space<vmem>>, vector<16x32xf32>
    %1 = arith.truncf %0 : vector<16x32xf32> to vector<16x32xbf16>
    %c0_1 = arith.constant 0 : index
    %c0_2 = arith.constant 0 : index
    %2 = vector.load %arg2[%c0_1, %c0_2] : memref<32x32xbf16, #tpu.memory_space<vmem>>, vector<32x32xbf16>
    %cst = arith.constant dense<0.000000e+00> : vector<16x32xf32>
    %3 = tpu.matmul %1, %2, %cst {dimension_numbers = #tpu.dot_dimension_numbers<[1], [0], [0], [1], [0, 0, 1, 1], [], []>} : vector<16x32xbf16>, vector<32x32xbf16>, vector<16x32xf32> -> vector<16x32xf32>
    %c0_3 = arith.constant 0 : index
    %c0_4 = arith.constant 0 : index
    %4 = vector.load %arg3[%c0_3, %c0_4] : memref<1x32xf32, #tpu.memory_space<vmem>>, vector<1x32xf32>
    %5 = vector.broadcast %4 : vector<1x32xf32> to vector<16x32xf32>
    %6 = arith.addf %3, %5 : vector<16x32xf32>
    %7 = arith.mulf %6, %6 : vector<16x32xf32>
    %cst_5 = arith.constant 0.0356774069 : f32
    %8 = vector.broadcast %cst_5 : f32 to vector<16x32xf32>
    %9 = arith.mulf %8, %7 : vector<16x32xf32>
    %cst_6 = arith.constant 0.797884583 : f32
    %10 = vector.broadcast %cst_6 : f32 to vector<16x32xf32>
    %11 = arith.addf %10, %9 : vector<16x32xf32>
    %12 = arith.mulf %6, %11 : vector<16x32xf32>
    %cst_7 = arith.constant 5.000000e-01 : f32
    %13 = vector.broadcast %cst_7 : f32 to vector<16x32xf32>
    %14 = arith.mulf %13, %6 : vector<16x32xf32>
    %15 = math.tanh %12 : vector<16x32xf32>
    %cst_8 = arith.constant 1.000000e+00 : f32
    %16 = vector.broadcast %cst_8 : f32 to vector<16x32xf32>
    %17 = arith.addf %16, %15 : vector<16x32xf32>
    %18 = arith.mulf %14, %17 : vector<16x32xf32>
    %cst_9 = arith.constant dense<0.000000e+00> : vector<16xf32>
    %19 = vector.multi_reduction <add>, %18, %cst_9 [1] : vector<16x32xf32> to vector<16xf32>
    %20 = vector.shape_cast %19 : vector<16xf32> to vector<16x1xf32>
    %21 = arith.mulf %18, %18 : vector<16x32xf32>
    %cst_10 = arith.constant dense<0.000000e+00> : vector<16xf32>
    %22 = vector.multi_reduction <add>, %21, %cst_10 [1] : vector<16x32xf32> to vector<16xf32>
    %23 = vector.shape_cast %22 : vector<16xf32> to vector<16x1xf32>
    %cst_11 = arith.constant 3.125000e-02 : f32
    %24 = vector.broadcast %cst_11 : f32 to vector<16x1xf32>
    %25 = arith.mulf %20, %24 : vector<16x1xf32>
    %cst_12 = arith.constant 3.125000e-02 : f32
    %26 = vector.broadcast %cst_12 : f32 to vector<16x1xf32>
    %27 = arith.mulf %23, %26 : vector<16x1xf32>
    %28 = arith.mulf %25, %25 : vector<16x1xf32>
    %29 = arith.subf %27, %28 : vector<16x1xf32>
    %cst_13 = arith.constant 0.000000e+00 : f32
    %30 = vector.broadcast %cst_13 : f32 to vector<16x1xf32>
    %31 = arith.maximumf %29, %30 : vector<16x1xf32>
    %cst_14 = arith.constant 9.99999974E-6 : f32
    %32 = vector.broadcast %cst_14 : f32 to vector<16x1xf32>
    %33 = arith.addf %31, %32 : vector<16x1xf32>
    %34 = math.rsqrt %33 : vector<16x1xf32>
    %35 = vector.broadcast %25 : vector<16x1xf32> to vector<16x32xf32>
    %36 = arith.subf %18, %35 : vector<16x32xf32>
    %37 = vector.broadcast %34 : vector<16x1xf32> to vector<16x32xf32>
    %38 = arith.mulf %36, %37 : vector<16x32xf32>
    %c0_15 = arith.constant 0 : index
    %c0_16 = arith.constant 0 : index
    %39 = vector.load %arg4[%c0_15, %c0_16] : memref<1x32xf32, #tpu.memory_space<vmem>>, vector<1x32xf32>
    %40 = vector.broadcast %39 : vector<1x32xf32> to vector<16x32xf32>
    %41 = arith.mulf %38, %40 : vector<16x32xf32>
    %c0_17 = arith.constant 0 : index
    %c0_18 = arith.constant 0 : index
    %42 = vector.load %arg5[%c0_17, %c0_18] : memref<1x32xf32, #tpu.memory_space<vmem>>, vector<1x32xf32>
    %43 = vector.broadcast %42 : vector<1x32xf32> to vector<16x32xf32>
    %44 = arith.addf %41, %43 : vector<16x32xf32>
    %c0_19 = arith.constant 0 : index
    %c0_20 = arith.constant 0 : index
    %45 = vector.load %arg6[%c0_19, %c0_20] : memref<16x32xf32, #tpu.memory_space<vmem>>, vector<16x32xf32>
    tpu.vector_store %arg6[%c0_19, %c0_20], %44 {strides = array<i32>} : memref<16x32xf32, #tpu.memory_space<vmem>>, vector<16x32xf32>,
    return
  }
  func.func @transform_0(%arg0: i32) -> (i32, i32) {
    %c0_i32 = arith.constant 0 : i32
    %c0_i32_0 = arith.constant 0 : i32
    return %arg0, %c0_i32 : i32, i32
  }
  func.func @transform_1(%arg0: i32) -> (i32, i32) {
    %c0_i32 = arith.constant 0 : i32
    %c0_i32_0 = arith.constant 0 : i32
    %c0_i32_1 = arith.constant 0 : i32
    return %c0_i32, %c0_i32_0 : i32, i32
  }
  func.func @transform_2(%arg0: i32) -> (i32, i32) {
    %c0_i32 = arith.constant 0 : i32
    %c0_i32_0 = arith.constant 0 : i32
    %c0_i32_1 = arith.constant 0 : i32
    return %c0_i32, %c0_i32_0 : i32, i32
  }
  func.func @transform_3(%arg0: i32) -> (i32, i32) {
    %c0_i32 = arith.constant 0 : i32
    %c0_i32_0 = arith.constant 0 : i32
    %c0_i32_1 = arith.constant 0 : i32
    return %c0_i32, %c0_i32_0 : i32, i32
  }
  func.func @transform_4(%arg0: i32) -> (i32, i32) {
    %c0_i32 = arith.constant 0 : i32
    %c0_i32_0 = arith.constant 0 : i32
    %c0_i32_1 = arith.constant 0 : i32
    return %c0_i32, %c0_i32_0 : i32, i32
  }
  func.func @transform_5(%arg0: i32) -> (i32, i32) {
    %c0_i32 = arith.constant 0 : i32
    %c0_i32_0 = arith.constant 0 : i32
    return %arg0, %c0_i32 : i32, i32
  }
}

</mosaic_0001>

<llo_original>
// kernel: tpu_custom_call.1
$region0: #{tpu_custom_call.1}
  #allocation0 [shape = 'u32[]', space=smem, size = 0x4, offset = 0x4, fixed_abs, tag = 'smem constant byte address 0x4 - core index']
  #allocation1 [shape = 'u32[144,128]{1,0:T(1,128)}', space=vmem, size = 0x12000, scoped, tag = 'internal scratch']
  %s0 = inlined_call_operand.hbm [shape: f32[16,32], index: 0, kind: input, shape index: {}]
  %s1 = inlined_call_operand.hbm [shape: bf16[32,32], index: 1, kind: input, shape index: {}]
  %s2 = inlined_call_operand.vmem [shape: f32[1,32], index: 2, kind: input, shape index: {}]
  %s3 = inlined_call_operand.vmem [shape: f32[1,32], index: 3, kind: input, shape index: {}]
  %s4 = inlined_call_operand.vmem [shape: f32[1,32], index: 4, kind: input, shape index: {}]
  %s5 = inlined_call_operand.hbm [shape: f32[16,32], index: 5, kind: output, shape index: {}]
  %s6 = sld [smem:[#allocation0]]
  $region38: #{tpu_custom_call.1} parent=0
    _
  %s8 = ssub.s32 1, %s6
  %s9 = scalar_select 0, %s8, %s6
  $region1: #{tpu_custom_call.1} parent=0
    #allocation2 [shape = 'u8[8192]{0}', space=vmem, size = 0x2000, scoped, tag = 'input window, operand 0, single buffered']
    #allocation3 [shape = 's32[1]{0}', space=sflag, size = 0x4, scoped, tag = 'scoped memory for tpu_custom_call.1']
    #allocation4 [shape = 's32[1]{0}', space=sflag, size = 0x4, scoped, tag = 'scoped memory for tpu_custom_call.1']
    #allocation5 [shape = 'u8[8192]{0}', space=vmem, size = 0x2000, scoped, tag = 'input window, operand 1, single buffered']
    #allocation6 [shape = 's32[1]{0}', space=sflag, size = 0x4, scoped, tag = 'scoped memory for tpu_custom_call.1']
    #allocation7 [shape = 'u8[8192]{0}', space=vmem, size = 0x2000, scoped, tag = 'output window, operand 0, single buffered']
    %10 = vsyncpa [#allocation3], 0
    %11 = vsyncpa [#allocation6], 0
    %12 = vsyncpa [#allocation4], 0
    // Predicated region
    $region2: #{tpu_custom_call.1} parent=1 // pred_check
      _
    $region3: #{tpu_custom_call.1} parent=1 // pred_check_branch
      %14 = sbr.rel (0) target = $region5
    $region4: #{tpu_custom_call.1} parent=1 // pred_region
      %s16 = ssub.s32 256, 256
      %17 = vsyncadd [#allocation3], %s16
      %s18 = sshll.u32 [#allocation2], 4
      %s19 = int_to_ptr.vmem [resolvable:$true] %s18
      %24 = dma.hbm_to_vmem [thread:$0]  %s0, 256, %s19, [#allocation3], 128, 128, 8
    $region5: #{tpu_custom_call.1} parent=1 // pred_fallthru
      _
    // Predicated region
    $region6: #{tpu_custom_call.1} parent=1 // pred_check
      _
    $region7: #{tpu_custom_call.1} parent=1 // pred_check_branch
      %26 = sbr.rel (0) target = $region9
    $region8: #{tpu_custom_call.1} parent=1 // pred_region
      %s28 = ssub.s32 256, 256
      %29 = vsyncadd [#allocation6], %s28
      %s30 = sshll.u32 [#allocation5], 4
      %s31 = int_to_ptr.vmem [resolvable:$true] %s30
      %36 = dma.hbm_to_vmem [thread:$0]  %s1, 256, %s31, [#allocation6], 64, 64, 4
    $region9: #{tpu_custom_call.1} parent=1 // pred_fallthru
      _
    // Predicated region
    $region10: #{tpu_custom_call.1} parent=1 // pred_check
      _
    $region11: #{tpu_custom_call.1} parent=1 // pred_check_branch
      %38 = sbr.rel (0) target = $region13
    $region12: #{tpu_custom_call.1} parent=1 // pred_region
      _
    $region13: #{tpu_custom_call.1} parent=1 // pred_fallthru
      _
    // Predicated region
    $region14: #{tpu_custom_call.1} parent=1 // pred_check
      _
    $region15: #{tpu_custom_call.1} parent=1 // pred_check_branch
      %40 = sbr.rel (0) target = $region17
    $region16: #{tpu_custom_call.1} parent=1 // pred_region
      _
    $region17: #{tpu_custom_call.1} parent=1 // pred_fallthru
      _
    // Predicated region
    $region18: #{tpu_custom_call.1} parent=1 // pred_check
      _
    $region19: #{tpu_custom_call.1} parent=1 // pred_check_branch
      %42 = sbr.rel (0) target = $region21
    $region20: #{tpu_custom_call.1} parent=1 // pred_region
      _
    $region21: #{tpu_custom_call.1} parent=1 // pred_fallthru
      _
    // Predicated region
    $region22: #{tpu_custom_call.1} parent=1 // pred_check
      _
    $region23: #{tpu_custom_call.1} parent=1 // pred_check_branch
      %44 = sbr.rel (0) target = $region25
    $region24: #{tpu_custom_call.1} parent=1 // pred_region
      %45 = dma.done [#allocation3], 256
    $region25: #{tpu_custom_call.1} parent=1 // pred_fallthru
      _
    // Predicated region
    $region26: #{tpu_custom_call.1} parent=1 // pred_check
      _
    $region27: #{tpu_custom_call.1} parent=1 // pred_check_branch
      %47 = sbr.rel (0) target = $region29
    $region28: #{tpu_custom_call.1} parent=1 // pred_region
      %48 = dma.done [#allocation6], 256
    $region29: #{tpu_custom_call.1} parent=1 // pred_fallthru
      _
    %v50 = vld [vmem:[#allocation2] sm:$0xff]
    %v51 = vld [vmem:[#allocation2 + $0x8] sm:$0xff]
    %v52 = vpack.c.bf16 %v51, %v50
    %v53 = vld [vmem:[#allocation5] sm:$0xf]
    %v54 = vld [vmem:[#allocation5 + $0x4] sm:$0xf]
    %v55 = vld [vmem:[#allocation5 + $0x8] sm:$0xf]
    %v56 = vld [vmem:[#allocation5 + $0xc] sm:$0xf]
    %v57 = vld [vmem:[%s2] sm:$0x1]
    %v59 = vlaneseq
    %v60 = vshrl.u32 %v59, 7
    %v61 = vsub.s32 0, %v60
    %v62 = vrot.slane %v57, %v61
    %v68 = vunpack.c.l.b16 %v53
    %v69 = vunpack.c.l.b16 %v54
    %v70 = vunpack.c.l.b16 %v55
    %v71 = vunpack.c.l.b16 %v56
    %v72 = vpack.c.b16 %v69, %v68
    %v73 = vpack.c.b16 %v71, %v70
    %vm76 = vcmask 261120
    %v78 = vsel %vm76, %v52, 0
    %80 = vmatprep.subr.bf16.mxu0 0
    %81 = vmatpush1.bf16.msra.mxu0 %v72
    %82 = vmatprep.subr.bf16.mxu0 0
    %83 = vmatpush1.bf16.msra.mxu0 %v73
    %84 = vmatprep.subr.bf16.mxu0 0
    %85 = vmatpush1.bf16.msra.mxu0 0
    %86 = vmatprep.subr.bf16.mxu0 0
    %87 = vmatpush1.bf16.msra.mxu0 0
    %88 = vmatprep.subr.bf16.mxu0 0
    %89 = vmatpush1.bf16.msra.mxu0 0
    %90 = vmatprep.subr.bf16.mxu0 0
    %91 = vmatpush1.bf16.msra.mxu0 0
    %92 = vmatprep.subr.bf16.mxu0 0
    %93 = vmatpush1.bf16.msra.mxu0 0
    %94 = vmatprep.subr.bf16.mxu0 0
    %95 = vmatpush1.bf16.msra.mxu0 0
    %96 = vmatprep.subr.bf16.mxu0 0
    %97 = vmatpush1.bf16.msra.mxu0 0
    %98 = vmatprep.subr.bf16.mxu0 0
    %99 = vmatpush1.bf16.msra.mxu0 0
    %100 = vmatprep.subr.bf16.mxu0 0
    %101 = vmatpush1.bf16.msra.mxu0 0
    %102 = vmatprep.subr.bf16.mxu0 0
    %103 = vmatpush1.bf16.msra.mxu0 0
    %104 = vmatprep.subr.bf16.mxu0 0
    %105 = vmatpush1.bf16.msra.mxu0 0
    %106 = vmatprep.subr.bf16.mxu0 0
    %107 = vmatpush1.bf16.msra.mxu0 0
    %108 = vmatprep.subr.bf16.mxu0 0
    %109 = vmatpush1.bf16.msra.mxu0 0
    %110 = vmatprep.subr.bf16.mxu0 0
    %111 = vmatpush1.bf16.msra.mxu0 0
    %112 = vmatprep.mubr.bf16.mxu0 0
    %113 = vmatmul.mubr.bf16.gmra.mrb[0].mxu0 %v78
    %v114 = vpop.f32.mrb[0].mxu0
    %v115 = vadd.f32 %v62, %v114
    %v116 = vpop.f32.mrb[0].mxu0
    %v117 = vpop.f32.mrb[0].mxu0
    %v118 = vadd.f32 %v62, %v117
    %v119 = vpop.f32.mrb[0].mxu0
    %120 = vdwg.mxu0
    %v121 = vmul.f32 %v115, %v115
    %v122 = vmul.f32 %v118, %v118
    %v123 = vmul.f32 %v121, 0.035677407
    %v124 = vmul.f32 %v122, 0.035677407
    %v125 = vadd.f32 %v123, 0.7978846
    %v126 = vadd.f32 %v124, 0.7978846
    %v127 = vmul.f32 %v115, %v125
    %v128 = vmul.f32 %v118, %v126
    %v129 = vmul.f32 %v115, 0.5
    %v130 = vmul.f32 %v118, 0.5
    %v131 = vtanh.pop %v127
    %v132 = vtanh.pop %v128
    %v133 = vadd.f32 %v131, 1.0
    %v134 = vadd.f32 %v132, 1.0
    %v135 = vmul.f32 %v129, %v133
    %v136 = vmul.f32 %v130, %v134
    %v137 = vsel %vm76, %v135, 0.0
    %138 = vadd.xlane.f32.xlu0 %v137
    %v139 = vpop.xlane.xlu0 %138
    %v140 = vsel %vm76, %v136, 0.0
    %141 = vadd.xlane.f32.xlu0 %v140
    %v142 = vpop.xlane.xlu0 %141
    %v143 = vmul.f32 %v135, %v135
    %v144 = vmul.f32 %v136, %v136
    %v145 = vsel %vm76, %v143, 0.0
    %146 = vadd.xlane.f32.xlu0 %v145
    %v147 = vpop.xlane.xlu0 %146
    %v148 = vsel %vm76, %v144, 0.0
    %149 = vadd.xlane.f32.xlu0 %v148
    %v150 = vpop.xlane.xlu0 %149
    %v151 = vmul.f32 %v139, 0.03125
    %v152 = vmul.f32 %v142, 0.03125
    %v153 = vmul.f32 %v147, 0.03125
    %v154 = vmul.f32 %v150, 0.03125
    %v155 = vmul.f32 %v151, %v151
    %v156 = vmul.f32 %v152, %v152
    %v157 = vsub.f32 %v153, %v155
    %v158 = vsub.f32 %v154, %v156
    %v159 = vmax.f32 %v157, 0.0
    %v160 = vmax.f32 %v158, 0.0
    %v161 = vadd.f32 %v159, 1e-05
    %v162 = vadd.f32 %v160, 1e-05
    %v163 = vrsqrt.pop %v161
    %v164 = vrsqrt.pop %v162
    %v165 = vsub.f32 %v135, %v151
    %v166 = vsub.f32 %v136, %v152
    %v167 = vmul.f32 %v165, %v163
    %v168 = vmul.f32 %v166, %v164
    %v169 = vld [vmem:[%s3] sm:$0x1]
    %v171 = vlaneseq
    %v172 = vshrl.u32 %v171, 7
    %v173 = vsub.s32 0, %v172
    %v174 = vrot.slane %v169, %v173
    %v176 = vmul.f32 %v167, %v174
    %v177 = vmul.f32 %v168, %v174
    %v178 = vld [vmem:[%s4] sm:$0x1]
    %v180 = vlaneseq
    %v181 = vshrl.u32 %v180, 7
    %v182 = vsub.s32 0, %v181
    %v183 = vrot.slane %v178, %v182
    %v185 = vadd.f32 %v176, %v183
    %v186 = vadd.f32 %v177, %v183
    %187 = vst.msk [vmem:[#allocation7] sm:$0xff] %vm76, %v185
    %188 = vst.msk [vmem:[#allocation7 + $0x8] sm:$0xff] %vm76, %v186
    // Predicated region
    $region30: #{tpu_custom_call.1} parent=1 // pred_check
      _
    $region31: #{tpu_custom_call.1} parent=1 // pred_check_branch
      %190 = sbr.rel (0) target = $region33
    $region32: #{tpu_custom_call.1} parent=1 // pred_region
      %s192 = ssub.s32 256, 256
      %193 = vsyncadd [#allocation4], %s192
      %s194 = sshll.u32 [#allocation7], 4
      %s195 = int_to_ptr.vmem [resolvable:$true] %s194
      %200 = dma.vmem_to_hbm [thread:$0]  %s195, 256, %s5, [#allocation4], 128, 128, 8
    $region33: #{tpu_custom_call.1} parent=1 // pred_fallthru
      _
    // Predicated region
    $region34: #{tpu_custom_call.1} parent=1 // pred_check
      _
    $region35: #{tpu_custom_call.1} parent=1 // pred_check_branch
      %202 = sbr.rel (0) target = $region37
    $region36: #{tpu_custom_call.1} parent=1 // pred_region
      %203 = dma.done [#allocation4], 256
    $region37: #{tpu_custom_call.1} parent=1 // pred_fallthru
      _
    %204 = vsyncpa [#allocation3], 1
    %205 = vsyncpa [#allocation6], 1
    %206 = vsyncpa [#allocation4], 1

</llo_original>
